<compile_context>
chip_gen: v7x
topology: tpu7x:2x2x1
jax: 0.10.0
libtpu: 0.0.40
codegen_flags: <defaults>
</compile_context>

<pallas_src>
import functools
import math

import jax
import jax.numpy as jnp
from jax.experimental import pallas as pl
from jax.experimental.pallas import tpu as pltpu


def _round_up(x, m):
    return (x + m - 1) // m * m


# Above this vocab size the one-hot matmul streams/multiplies far more data than a
# plain row gather, so route to the DMA gather path.
_ONEHOT_MAX_VOCAB = 2048


# ----------------------------------------------------------------------------
# Path A (small / medium vocab): fused mask + one-hot MXU gather.
#   grid = (token_blocks, d_blocks, vocab_blocks); vocab axis is the reduction
#   (last).  Mask binarization is applied to the table tile in-kernel.
# ----------------------------------------------------------------------------
def _onehot_gather_kernel(ids_ref, w_ref, m_ref, out_ref, *acc, threshold):
    # For f32 outputs accumulate straight into the resident out block (no scratch).
    acc_ref = acc[0] if acc else out_ref
    vi = pl.program_id(2)

    @pl.when(vi == 0)
    def _():
        acc_ref[...] = jnp.zeros_like(acc_ref)

    tb = ids_ref.shape[0]
    tv = w_ref.shape[0]
    w = w_ref[...]
    # Binarizer forward fused into the table tile: where(mask > threshold, w, 0).
    tbl = jnp.where(m_ref[...] > threshold, w, jnp.zeros_like(w))
    # One-hot in the table dtype (entries are exact 0/1); the vocab offset touches
    # only the (TB,1) ids, not the (TB,tv) iota.
    ids_local = ids_ref[...] - vi * tv                        # (TB, 1)
    col = jax.lax.broadcasted_iota(jnp.int32, (tb, tv), 1)    # (TB, tv)
    onehot = (col == ids_local).astype(w.dtype)
    acc_ref[...] += jnp.dot(onehot, tbl, preferred_element_type=jnp.float32)

    if acc:
        @pl.when(vi == pl.num_programs(2) - 1)
        def _():
            out_ref[...] = acc_ref[...].astype(out_ref.dtype)


def _onehot_path(ids, weight, mask_real, threshold):
    V, D = weight.shape
    T = ids.shape[0]
    dtype = weight.dtype
    use_acc = dtype != jnp.float32

    # Tile sizes; minimal padding (D only to a multiple of 128, V only to the tile).
    Dp = _round_up(D, 128)
    bd = math.gcd(Dp, 512)                      # 128 / 256 / 512, always divides Dp
    tv = _round_up(V, 8) if V < 128 else 128    # vocab tile (v5e MXU K = 128)
    Vp = _round_up(V, tv)

    t8 = _round_up(max(T, 1), 8)
    # >= 2 token blocks when possible so both v7x TensorCores get work.
    TB = min(128, max(8, _round_up(t8 // 2, 8))) if t8 >= 16 else t8
    Tp = _round_up(t8, TB)

    w_p = weight if (Vp, Dp) == (V, D) else jnp.pad(weight, ((0, Vp - V), (0, Dp - D)))
    m_p = mask_real if (Vp, Dp) == (V, D) else jnp.pad(mask_real,
                                                       ((0, Vp - V), (0, Dp - D)))
    ids_p = (ids if Tp == T else jnp.pad(ids, (0, Tp - T))).reshape(Tp, 1)

    elt = jnp.dtype(dtype).itemsize
    ws = (2 * 2 * tv * bd * elt            # weight + mask tiles, double buffered
          + 2 * TB * bd * elt              # out tile, double buffered
          + 2 * TB * 4                     # ids
          + (TB * bd * 4 if use_acc else 0))
    vmem_limit = int(min(max(6 * ws, 8 << 20), 32 << 20))

    scratch = [pltpu.VMEM((TB, bd), jnp.float32)] if use_acc else []

    out = pl.pallas_call(
        functools.partial(_onehot_gather_kernel, threshold=threshold),
        grid_spec=pltpu.PrefetchScalarGridSpec(
            num_scalar_prefetch=0,
            grid=(Tp // TB, Dp // bd, Vp // tv),
            in_specs=[
                pl.BlockSpec((TB, 1), lambda ti, di, vi: (ti, 0)),     # token ids
                pl.BlockSpec((tv, bd), lambda ti, di, vi: (vi, di)),   # weight tile
                pl.BlockSpec((tv, bd), lambda ti, di, vi: (vi, di)),   # mask tile
            ],
            out_specs=pl.BlockSpec((TB, bd), lambda ti, di, vi: (ti, di)),
            scratch_shapes=scratch,
        ),
        out_shape=jax.ShapeDtypeStruct((Tp, Dp), dtype),
        compiler_params=pltpu.CompilerParams(
            dimension_semantics=("parallel", "parallel", "arbitrary"),
            vmem_limit_bytes=vmem_limit),
    )(ids_p, w_p, m_p)
    return out[:T, :D]


# ----------------------------------------------------------------------------
# Path B (large vocab): scalar-prefetch ids + manual per-row DMA gather.
#   Weight and mask stay in HBM (pl.ANY); only the requested rows are moved,
#   then the mask is binarized and applied on the VPU.
# ----------------------------------------------------------------------------
def _dma_gather_kernel(ids_ref, w_hbm, m_hbm, out_ref, w_buf, m_buf, sem,
                       *, threshold, tb):
    t0 = pl.program_id(0) * tb
    copies = []
    for r in range(tb):                               # static unroll (tb == 8)
        row = ids_ref[t0 + r]
        cw = pltpu.make_async_copy(w_hbm.at[pl.ds(row, 1), :],
                                   w_buf.at[pl.ds(r, 1), :], sem.at[0, r])
        cm = pltpu.make_async_copy(m_hbm.at[pl.ds(row, 1), :],
                                   m_buf.at[pl.ds(r, 1), :], sem.at[1, r])
        cw.start()
        cm.start()
        copies.append((cw, cm))
    for cw, cm in copies:
        cw.wait()
        cm.wait()
    w = w_buf[...]
    out_ref[...] = jnp.where(m_buf[...] > threshold, w,
                             jnp.zeros_like(w)).astype(out_ref.dtype)
    # TODO(synk): double-buffer the row DMAs across token blocks (prefetch block i+1
    # while computing block i) to hide DMA latency at very large T.


def _dma_gather_path(ids, weight, mask_real, threshold):
    V, D = weight.shape
    T = ids.shape[0]
    TB = 8
    Tp = _round_up(max(T, 1), TB)
    ids_p = ids if Tp == T else jnp.pad(ids, (0, Tp - T))

    out = pl.pallas_call(
        functools.partial(_dma_gather_kernel, threshold=threshold, tb=TB),
        grid_spec=pltpu.PrefetchScalarGridSpec(
            num_scalar_prefetch=1,
            grid=(Tp // TB,),
            in_specs=[pl.BlockSpec(memory_space=pl.ANY),    # weight, stays in HBM
                      pl.BlockSpec(memory_space=pl.ANY)],   # mask, stays in HBM
            out_specs=pl.BlockSpec((TB, D), lambda t, ids: (t, 0)),
            scratch_shapes=[pltpu.VMEM((TB, D), weight.dtype),
                            pltpu.VMEM((TB, D), mask_real.dtype),
                            pltpu.SemaphoreType.DMA((2, TB))]),
        out_shape=jax.ShapeDtypeStruct((Tp, D), weight.dtype),
        compiler_params=pltpu.CompilerParams(
            dimension_semantics=("parallel",)),
    )(ids_p, weight, mask_real)
    return out[:T]


def masked_embedding(x, weight, mask_real, *, threshold=0.01, padding_idx=None,
                     force_gather=False):
    """Forward pass of MaskedEmbedding.

    padding_idx in F.embedding only affects gradients; the forward pass is a plain
    row gather of the masked table, so it is accepted and ignored here.
    Out-of-range ids are clipped (PyTorch would raise instead).
    """
    V, D = weight.shape
    orig_shape = x.shape
    ids = jnp.clip(x.reshape(-1).astype(jnp.int32), 0, V - 1)
    if force_gather or V > _ONEHOT_MAX_VOCAB:
        out = _dma_gather_path(ids, weight, mask_real, threshold)
    else:
        out = _onehot_path(ids, weight, mask_real, threshold)
    return out.reshape(*orig_shape, D)


if __name__ == "__main__":
    # Deterministic parameter / input construction (shapes implied by the module).
    vocab, embed_dim = 64, 128
    batch, seq = 2, 8
    mask_scale = 0.02
    threshold = 0.01
    initial_sparsity = 0.1

    key = jax.random.PRNGKey(0)
    k_w, k_m, k_x = jax.random.split(key, 3)

    # self.weight : the (frozen) embedding table.
    weight = jax.random.normal(k_w, (vocab, embed_dim), dtype=jnp.float32) * 0.1

    # self.mask_real ~ Uniform(left_scale, right_scale), as in __init__.
    left_scale = -1.0 * mask_scale
    right_scale = (mask_scale + threshold) / initial_sparsity - mask_scale
    mask_real = jax.random.uniform(
        k_m, (vocab, embed_dim), dtype=jnp.float32,
        minval=left_scale, maxval=right_scale)

    # Token ids.
    x = jax.random.randint(k_x, (batch, seq), 0, vocab, dtype=jnp.int32)

    # Pure-JAX reference of the PyTorch forward.
    mask_bin = jnp.where(mask_real > threshold, 1.0, 0.0).astype(weight.dtype)
    ref = (mask_bin * weight)[x]

    # Path A: fused one-hot MXU gather (the default at this vocab size).
    out = masked_embedding(x, weight, mask_real,
                           threshold=threshold, padding_idx=0)
    out = jax.block_until_ready(out)
    assert out.shape == (batch, seq, embed_dim)
    assert jnp.allclose(out, ref, atol=1e-6, rtol=1e-6), "one-hot path mismatch"

    # Path B: large-vocab DMA row gather, exercised here at small shapes so the
    # alternate kernel is also validated on hardware.
    out_g = masked_embedding(x, weight, mask_real,
                             threshold=threshold, padding_idx=0, force_gather=True)
    out_g = jax.block_until_ready(out_g)
    assert jnp.allclose(out_g, ref, atol=1e-6, rtol=1e-6), "gather path mismatch"

    print("KERNEL_OK")
</pallas_src>

<mosaic_0001>
module attributes {stable_mosaic.version = 11 : i64} {
  func.func @_onehot_gather_kernel(%arg0: i32, %arg1: i32, %arg2: i32, %arg3: memref<8x1xi32, #tpu.memory_space<vmem>>, %arg4: memref<64x128xf32, #tpu.memory_space<vmem>>, %arg5: memref<64x128xf32, #tpu.memory_space<vmem>>, %arg6: memref<8x128xf32, #tpu.memory_space<vmem>>) attributes {dimension_semantics = [#tpu.dimension_semantics<parallel>, #tpu.dimension_semantics<parallel>, #tpu.dimension_semantics<arbitrary>], iteration_bounds = array<i64: 2, 1, 1>, scalar_prefetch = 0 : i64, scratch_operands = 0 : i64, tpu.core_type = #tpu.core_type<tc>, window_params = [{transform_indices = @transform_0, window_bounds = array<i64: 8, 1>}, {transform_indices = @transform_1, window_bounds = array<i64: 64, 128>}, {transform_indices = @transform_2, window_bounds = array<i64: 64, 128>}, {transform_indices = @transform_3, window_bounds = array<i64: 8, 128>}]} {
    %c0_i32 = arith.constant 0 : i32
    %0 = arith.cmpi eq, %arg2, %c0_i32 : i32
    %1 = arith.extui %0 : i1 to i32
    %c0_i32_0 = arith.constant 0 : i32
    %2 = arith.cmpi ne, %1, %c0_i32_0 : i32
    scf.if %2 {
      %cst_12 = arith.constant 0.000000e+00 : f32
      %22 = vector.broadcast %cst_12 : f32 to vector<8x128xf32>
      %c0_13 = arith.constant 0 : index
      %c0_14 = arith.constant 0 : index
      %23 = vector.load %arg6[%c0_13, %c0_14] : memref<8x128xf32, #tpu.memory_space<vmem>>, vector<8x128xf32>
      tpu.vector_store %arg6[%c0_13, %c0_14], %22 {strides = array<i32>} : memref<8x128xf32, #tpu.memory_space<vmem>>, vector<8x128xf32>,
    } else {
    }
    %c0 = arith.constant 0 : index
    %c0_1 = arith.constant 0 : index
    %3 = vector.load %arg4[%c0, %c0_1] : memref<64x128xf32, #tpu.memory_space<vmem>>, vector<64x128xf32>
    %c0_2 = arith.constant 0 : index
    %c0_3 = arith.constant 0 : index
    %4 = vector.load %arg5[%c0_2, %c0_3] : memref<64x128xf32, #tpu.memory_space<vmem>>, vector<64x128xf32>
    %cst = arith.constant 0.00999999977 : f32
    %5 = vector.broadcast %cst : f32 to vector<64x128xf32>
    %6 = arith.cmpf ogt, %4, %5 : vector<64x128xf32>
    %cst_4 = arith.constant 0.000000e+00 : f32
    %7 = vector.broadcast %cst_4 : f32 to vector<64x128xf32>
    %8 = arith.select %6, %3, %7 : vector<64x128xi1>, vector<64x128xf32>
    %c0_5 = arith.constant 0 : index
    %c0_6 = arith.constant 0 : index
    %9 = vector.load %arg3[%c0_5, %c0_6] : memref<8x1xi32, #tpu.memory_space<vmem>>, vector<8x1xi32>
    %c64_i32 = arith.constant 64 : i32
    %10 = arith.muli %arg2, %c64_i32 : i32
    %11 = vector.broadcast %10 : i32 to vector<8x1xi32>
    %12 = arith.subi %9, %11 : vector<8x1xi32>
    %13 = tpu.iota {dimensions = array<i32: 1>} : vector<8x64xi32>
    %14 = vector.broadcast %12 : vector<8x1xi32> to vector<8x64xi32>
    %15 = arith.cmpi eq, %13, %14 : vector<8x64xi32>
    %16 = arith.extui %15 : vector<8x64xi1> to vector<8x64xi32>
    %17 = arith.sitofp %16 : vector<8x64xi32> to vector<8x64xf32>
    %c0_7 = arith.constant 0 : index
    %c0_8 = arith.constant 0 : index
    %18 = vector.load %arg6[%c0_7, %c0_8] : memref<8x128xf32, #tpu.memory_space<vmem>>, vector<8x128xf32>
    %cst_9 = arith.constant dense<0.000000e+00> : vector<8x128xf32>
    %19 = tpu.matmul %17, %8, %cst_9 {dimension_numbers = #tpu.dot_dimension_numbers<[1], [0], [0], [1], [0, 0, 1, 1], [], []>} : vector<8x64xf32>, vector<64x128xf32>, vector<8x128xf32> -> vector<8x128xf32>
    %20 = arith.addf %18, %19 : vector<8x128xf32>
    %c0_10 = arith.constant 0 : index
    %c0_11 = arith.constant 0 : index
    %21 = vector.load %arg6[%c0_10, %c0_11] : memref<8x128xf32, #tpu.memory_space<vmem>>, vector<8x128xf32>
    tpu.vector_store %arg6[%c0_10, %c0_11], %20 {strides = array<i32>} : memref<8x128xf32, #tpu.memory_space<vmem>>, vector<8x128xf32>,
    return
  }
  func.func @transform_0(%arg0: i32, %arg1: i32, %arg2: i32) -> (i32, i32) {
    %c0_i32 = arith.constant 0 : i32
    %c0_i32_0 = arith.constant 0 : i32
    return %arg0, %c0_i32 : i32, i32
  }
  func.func @transform_1(%arg0: i32, %arg1: i32, %arg2: i32) -> (i32, i32) {
    %c0_i32 = arith.constant 0 : i32
    return %arg2, %arg1 : i32, i32
  }
  func.func @transform_2(%arg0: i32, %arg1: i32, %arg2: i32) -> (i32, i32) {
    %c0_i32 = arith.constant 0 : i32
    return %arg2, %arg1 : i32, i32
  }
  func.func @transform_3(%arg0: i32, %arg1: i32, %arg2: i32) -> (i32, i32) {
    %c0_i32 = arith.constant 0 : i32
    return %arg0, %arg1 : i32, i32
  }
}

</mosaic_0001>

<llo_original>
// kernel: tpu_custom_call.1
$region0: #{tpu_custom_call.1}
  #allocation0 [shape = 'u32[]', space=smem, size = 0x4, offset = 0x4, fixed_abs, tag = 'smem constant byte address 0x4 - core index']
  #allocation1 [shape = 'u32[144,128]{1,0:T(1,128)}', space=vmem, size = 0x12000, scoped, tag = 'internal scratch']
  %s0 = inlined_call_operand.vmem [shape: s32[16,1], index: 0, kind: input, shape index: {}]
  %s1 = inlined_call_operand.hbm [shape: f32[64,128], index: 1, kind: input, shape index: {}]
  %s2 = inlined_call_operand.hbm [shape: f32[64,128], index: 2, kind: input, shape index: {}]
  %s3 = inlined_call_operand.hbm [shape: f32[16,128], index: 3, kind: output, shape index: {}]
  %s4 = sld [smem:[#allocation0]]
  $region57: #{tpu_custom_call.1} parent=0
    _
  %s6 = ssub.s32 1, %s4
  %s7 = scalar_select 0, %s6, %s4
  $region1: #{tpu_custom_call.1} parent=0
    #allocation2 [shape = 'u8[32768]{0}', space=vmem, size = 0x8000, scoped, tag = 'input window, operand 1, single buffered']
    #allocation3 [shape = 's32[2]{0}', space=sflag, size = 0x8, scoped, tag = 'scoped memory for tpu_custom_call.1']
    #allocation4 [shape = 's32[2]{0}', space=sflag, size = 0x8, scoped, tag = 'scoped memory for tpu_custom_call.1']
    #allocation5 [shape = 'u8[32768]{0}', space=vmem, size = 0x8000, scoped, tag = 'input window, operand 2, single buffered']
    #allocation6 [shape = 's32[1]{0}', space=sflag, size = 0x4, scoped, tag = 'scoped memory for tpu_custom_call.1']
    #allocation7 [shape = 'u8[8192]{0}', space=vmem, size = 0x2000, scoped, tag = 'output window, operand 0']
    %8 = vsyncpa [#allocation3], 0
    %9 = vsyncpa [#allocation6], 0
    %10 = vsyncpa [#allocation4], 0
    %s11 = scalar_lea.sflag [#allocation4], 1
    %12 = vsyncpa %s11, 0
    loop: start=0, step=1, limit=4
    $region2: #{tpu_custom_call.1} parent=1 // loop_pre_header
      _
    $region3: #{tpu_custom_call.1} parent=1 // loop_header
      %s14 = sphi 0, %s18
      %p15 = scmp.ge.s32.totalorder %s14, 4
      %s21 = sphi 0, %s40
      %s22 = sphi 0, %s36
      %s23 = sphi 0, %s32
      %s24 = sphi 0, %s21
      %s25 = sphi 0, %s22
      %s26 = sphi 0, %s23
      %s27 = sphi 0, %s24
      %s28 = sphi 0, %s25
      %s29 = sphi 0, %s26
      %s43 = sphi 0, %s45
      %s46 = sphi 0, %s43
      %s47 = sphi 0, %s46
      %s63 = sphi 0, %s47
      %s71 = sphi 0, %s73
      %s74 = sphi 0, %s71
      %s75 = sphi 0, %s74
      %s91 = sphi 0, %s75
      %s99 = sphi 0, %s101
      %s102 = sphi 0, %s99
      %s103 = sphi 0, %s102
      %s119 = sphi 0, %s103
      %s127 = sphi 0, %s129
      %s130 = sphi 0, %s127
      %s131 = sphi 0, %s130
      %s147 = sphi 0, %s131
    $region4: #{tpu_custom_call.1} parent=1 // loop_header_branch
      %17 = sbr.rel (%p15) target = $region8
    $region5: #{tpu_custom_call.1} parent=1 // loop_body
      %s19 = ssub.s32 %s14, 1
      %s20 = ssub.s32 %s14, 2
      %s30 = sadd.s32 1, %s23
      %p31 = scmp.ge.s32.totalorder %s30, 1
      %s32 = scalar_select %p31, 0, %s30
      %s33 = sadd.s32 1, %s22
      %s34 = scalar_select %p31, %s33, %s22
      %p35 = scmp.ge.s32.totalorder %s34, 1
      %s36 = scalar_select %p35, 0, %s34
      %s37 = sadd.s32 1, %s21
      %s38 = scalar_select %p35, %s37, %s21
      %p39 = scmp.ge.s32.totalorder %s38, 2
      %s40 = scalar_select %p39, 0, %s38
      %s41 = ssub.s32 %s21, %s40
      %p42 = scmp.eq.s32.totalorder %s41, 0
      %s44 = sadd.s32 %s43, 1
      %s45 = scalar_select %p42, %s43, %s44
      %p48 = pneg %p42
      %p49 = scmp.eq.s32.totalorder %s14, 1
      %p50 = por %p48, %p49
      %p51 = scmp.ne.s32.totalorder %s43, %s46
      %p52 = scmp.eq.s32.totalorder %s14, 0
      %p53 = por %p51, %p52
      %p54 = scmp.ne.s32.totalorder %s43, %s46
      %p55 = scmp.eq.s32.totalorder %s19, 1
      %p56 = por %p54, %p55
      %p57 = scmp.ne.s32.totalorder %s46, %s47
      %p58 = scmp.eq.s32.totalorder %s19, 0
      %p59 = por %p57, %p58
      %p60 = scmp.ne.s32.totalorder %s46, %s47
      %p61 = scmp.eq.s32.totalorder %s20, 1
      %p62 = por %p60, %p61
      %p64 = scmp.ne.s32.totalorder %s47, %s63
      %p65 = scmp.eq.s32.totalorder %s20, 0
      %p66 = por %p64, %p65
      %s67 = ssub.s32 %s23, %s32
      %s68 = ssub.s32 %s22, %s36
      %s69 = sor.u32 %s67, %s68
      %p70 = scmp.eq.s32.totalorder %s69, 0
      %s72 = sadd.s32 %s71, 1
      %s73 = scalar_select %p70, %s71, %s72
      %p76 = pneg %p70
      %p77 = scmp.eq.s32.totalorder %s14, 1
      %p78 = por %p76, %p77
      %p79 = scmp.ne.s32.totalorder %s71, %s74
      %p80 = scmp.eq.s32.totalorder %s14, 0
      %p81 = por %p79, %p80
      %p82 = scmp.ne.s32.totalorder %s71, %s74
      %p83 = scmp.eq.s32.totalorder %s19, 1
      %p84 = por %p82, %p83
      %p85 = scmp.ne.s32.totalorder %s74, %s75
      %p86 = scmp.eq.s32.totalorder %s19, 0
      %p87 = por %p85, %p86
      %p88 = scmp.ne.s32.totalorder %s74, %s75
      %p89 = scmp.eq.s32.totalorder %s20, 1
      %p90 = por %p88, %p89
      %p92 = scmp.ne.s32.totalorder %s75, %s91
      %p93 = scmp.eq.s32.totalorder %s20, 0
      %p94 = por %p92, %p93
      %s95 = ssub.s32 %s23, %s32
      %s96 = ssub.s32 %s22, %s36
      %s97 = sor.u32 %s95, %s96
      %p98 = scmp.eq.s32.totalorder %s97, 0
      %s100 = sadd.s32 %s99, 1
      %s101 = scalar_select %p98, %s99, %s100
      %p104 = pneg %p98
      %p105 = scmp.eq.s32.totalorder %s14, 1
      %p106 = por %p104, %p105
      %p107 = scmp.ne.s32.totalorder %s99, %s102
      %p108 = scmp.eq.s32.totalorder %s14, 0
      %p109 = por %p107, %p108
      %p110 = scmp.ne.s32.totalorder %s99, %s102
      %p111 = scmp.eq.s32.totalorder %s19, 1
      %p112 = por %p110, %p111
      %p113 = scmp.ne.s32.totalorder %s102, %s103
      %p114 = scmp.eq.s32.totalorder %s19, 0
      %p115 = por %p113, %p114
      %p116 = scmp.ne.s32.totalorder %s102, %s103
      %p117 = scmp.eq.s32.totalorder %s20, 1
      %p118 = por %p116, %p117
      %p120 = scmp.ne.s32.totalorder %s103, %s119
      %p121 = scmp.eq.s32.totalorder %s20, 0
      %p122 = por %p120, %p121
      %s123 = ssub.s32 %s21, %s40
      %s124 = ssub.s32 %s22, %s36
      %s125 = sor.u32 %s123, %s124
      %p126 = scmp.eq.s32.totalorder %s125, 0
      %s128 = sadd.s32 %s127, 1
      %s129 = scalar_select %p126, %s127, %s128
      %p132 = pneg %p126
      %p133 = scmp.eq.s32.totalorder %s14, 1
      %p134 = por %p132, %p133
      %p135 = scmp.ne.s32.totalorder %s127, %s130
      %p136 = scmp.eq.s32.totalorder %s14, 0
      %p137 = por %p135, %p136
      %p138 = scmp.ne.s32.totalorder %s127, %s130
      %p139 = scmp.eq.s32.totalorder %s19, 1
      %p140 = por %p138, %p139
      %p141 = scmp.ne.s32.totalorder %s130, %s131
      %p142 = scmp.eq.s32.totalorder %s19, 0
      %p143 = por %p141, %p142
      %p144 = scmp.ne.s32.totalorder %s130, %s131
      %p145 = scmp.eq.s32.totalorder %s20, 1
      %p146 = por %p144, %p145
      %p148 = scmp.ne.s32.totalorder %s131, %s147
      %p149 = scmp.eq.s32.totalorder %s20, 0
      %p150 = por %p148, %p149
      %p151 = scmp.le.s32.totalorder 1, %s14
      %p152 = scmp.lt.s32.totalorder %s14, 3
      %p153 = pnand %p151, %p152
      %p154 = pneg %p153
      // Predicated region
      $region9: #{tpu_custom_call.1} parent=5 // pred_check
        _
      $region10: #{tpu_custom_call.1} parent=5 // pred_check_branch
        %156 = sbr.rel (%p153) target = $region12
      $region11: #{tpu_custom_call.1} parent=5 // pred_region
        %s157 = ssub.s32 %s14, 1
        // Predicated region
        $region13: #{tpu_custom_call.1} parent=11 // pred_check
          %p158 = pneg %p87
        $region14: #{tpu_custom_call.1} parent=11 // pred_check_branch
          %160 = sbr.rel (%p158) target = $region16
        $region15: #{tpu_custom_call.1} parent=11 // pred_region
          %s161 = smul.u32 8, %s26
          %s163 = ssub.s32 1024, 1024
          %164 = vsyncadd [#allocation3], %s163
          %s165 = sadd.s32 %s25, %s161
          %s166 = smul.addr %s165, 128
          %s167 = scalar_lea.hbm %s1, %s166
          %s168 = sshll.u32 [#allocation2], 4
          %s169 = int_to_ptr.vmem [resolvable:$true] %s168
          %174 = dma.hbm_to_vmem [thread:$0]  %s167, 1024, %s169, [#allocation3], 128, 128, 8
        $region16: #{tpu_custom_call.1} parent=11 // pred_fallthru
          _
        // Predicated region
        $region17: #{tpu_custom_call.1} parent=11 // pred_check
          %p175 = pneg %p115
        $region18: #{tpu_custom_call.1} parent=11 // pred_check_branch
          %177 = sbr.rel (%p175) target = $region20
        $region19: #{tpu_custom_call.1} parent=11 // pred_region
          %s178 = smul.u32 8, %s26
          %s180 = ssub.s32 1024, 1024
          %181 = vsyncadd [#allocation6], %s180
          %s182 = sadd.s32 %s25, %s178
          %s183 = smul.addr %s182, 128
          %s184 = scalar_lea.hbm %s2, %s183
          %s185 = sshll.u32 [#allocation5], 4
          %s186 = int_to_ptr.vmem [resolvable:$true] %s185
          %191 = dma.hbm_to_vmem [thread:$0]  %s184, 1024, %s186, [#allocation6], 128, 128, 8
        $region20: #{tpu_custom_call.1} parent=11 // pred_fallthru
          _
      $region12: #{tpu_custom_call.1} parent=5 // pred_fallthru
        _
      %p192 = scmp.lt.s32.totalorder %s14, 2
      // Predicated region
      $region21: #{tpu_custom_call.1} parent=5 // pred_check
        %p193 = pneg %p192
      $region22: #{tpu_custom_call.1} parent=5 // pred_check_branch
        %195 = sbr.rel (%p193) target = $region24
      $region23: #{tpu_custom_call.1} parent=5 // pred_region
        // Predicated region
        $region25: #{tpu_custom_call.1} parent=23 // pred_check
          %p196 = pneg %p53
        $region26: #{tpu_custom_call.1} parent=23 // pred_check_branch
          %198 = sbr.rel (%p196) target = $region28
        $region27: #{tpu_custom_call.1} parent=23 // pred_region
          %p199 = scmp.lt.s32.totalorder %s21, 1
          %s200 = scalar_select %p199, %s21, 1
          %s201 = smul.addr %s200, 8
          %s202 = scalar_lea.vmem %s0, %s201
        $region28: #{tpu_custom_call.1} parent=23 // pred_fallthru
          _
      $region24: #{tpu_custom_call.1} parent=5 // pred_fallthru
        _
      %p203 = scmp.le.s32.totalorder 1, %s14
      %p204 = scmp.lt.s32.totalorder %s14, 3
      %p205 = pnand %p203, %p204
      %p206 = pneg %p205
      // Predicated region
      $region29: #{tpu_custom_call.1} parent=5 // pred_check
        _
      $region30: #{tpu_custom_call.1} parent=5 // pred_check_branch
        %208 = sbr.rel (%p205) target = $region32
      $region31: #{tpu_custom_call.1} parent=5 // pred_region
        %s209 = ssub.s32 %s14, 1
        // Predicated region
        $region33: #{tpu_custom_call.1} parent=31 // pred_check
          %p210 = pneg %p87
        $region34: #{tpu_custom_call.1} parent=31 // pred_check_branch
          %212 = sbr.rel (%p210) target = $region36
        $region35: #{tpu_custom_call.1} parent=31 // pred_region
          %213 = dma.done [#allocation3], 1024
        $region36: #{tpu_custom_call.1} parent=31 // pred_fallthru
          _
        // Predicated region
        $region37: #{tpu_custom_call.1} parent=31 // pred_check
          %p214 = pneg %p115
        $region38: #{tpu_custom_call.1} parent=31 // pred_check_branch
          %216 = sbr.rel (%p214) target = $region40
        $region39: #{tpu_custom_call.1} parent=31 // pred_region
          %217 = dma.done [#allocation6], 1024
        $region40: #{tpu_custom_call.1} parent=31 // pred_fallthru
          _
        %p218 = scmp.lt.s32.totalorder %s24, 1
        %s219 = scalar_select %p218, %s24, 1
        %s220 = smul.addr %s219, 8
        %s221 = scalar_lea.vmem %s0, %s220
        %p222 = pneg %p59
        %p223 = pneg %p56
        %p224 = pneg %p87
        %p225 = pneg %p84
        %p226 = pneg %p115
        %p227 = pneg %p112
        %p228 = pneg %p143
        %p229 = pneg %p140
        %s230 = sand.u32 %s130, 1
        %s231 = scalar_lea.sflag [#allocation4], %s230
        %s232 = sand.u32 %s130, 1
        %s233 = smul.addr %s232, 8
        %s234 = scalar_lea.vmem [#allocation7], %s233
        %p235 = scmp.lt.s32.totalorder %s24, 1
        %s236 = scalar_select %p235, %s24, 1
        %s237 = smul.addr %s236, 8
        %s238 = scalar_lea.vmem %s0, %s237
        %s239 = smul.u32 8, %s26
        %s240 = smul.u32 8, %s26
        %p241 = scmp.eq.s32.totalorder %s26, 0
        // Predicated region
        $region41: #{tpu_custom_call.1} parent=31 // pred_check
          %p242 = pneg %p241
        $region42: #{tpu_custom_call.1} parent=31 // pred_check_branch
          %244 = sbr.rel (%p242) target = $region44
        $region43: #{tpu_custom_call.1} parent=31 // pred_region
          %245 = vst [vmem:[%s234] sm:$0xff] 0.0
        $region44: #{tpu_custom_call.1} parent=31 // pred_fallthru
          _
        %v246 = vld [vmem:[#allocation2] sm:$0xff]
        %v247 = vld [vmem:[#allocation2 + $0x8] sm:$0xff]
        %v248 = vld [vmem:[#allocation2 + $0x10] sm:$0xff]
        %v249 = vld [vmem:[#allocation2 + $0x18] sm:$0xff]
        %v250 = vld [vmem:[#allocation2 + $0x20] sm:$0xff]
        %v251 = vld [vmem:[#allocation2 + $0x28] sm:$0xff]
        %v252 = vld [vmem:[#allocation2 + $0x30] sm:$0xff]
        %v253 = vld [vmem:[#allocation2 + $0x38] sm:$0xff]
        %v254 = vld [vmem:[#allocation5] sm:$0xff]
        %v255 = vld [vmem:[#allocation5 + $0x8] sm:$0xff]
        %v256 = vld [vmem:[#allocation5 + $0x10] sm:$0xff]
        %v257 = vld [vmem:[#allocation5 + $0x18] sm:$0xff]
        %v258 = vld [vmem:[#allocation5 + $0x20] sm:$0xff]
        %v259 = vld [vmem:[#allocation5 + $0x28] sm:$0xff]
        %v260 = vld [vmem:[#allocation5 + $0x30] sm:$0xff]
        %v261 = vld [vmem:[#allocation5 + $0x38] sm:$0xff]
        %vm262 = vcmp.gt.f32.partialorder %v254, 0.01
        %vm263 = vcmp.gt.f32.partialorder %v255, 0.01
        %vm264 = vcmp.gt.f32.partialorder %v256, 0.01
        %vm265 = vcmp.gt.f32.partialorder %v257, 0.01
        %vm266 = vcmp.gt.f32.partialorder %v258, 0.01
        %vm267 = vcmp.gt.f32.partialorder %v259, 0.01
        %vm268 = vcmp.gt.f32.partialorder %v260, 0.01
        %vm269 = vcmp.gt.f32.partialorder %v261, 0.01
        %v270 = vsel %vm262, %v246, 0.0
        %v271 = vsel %vm263, %v247, 0.0
        %v272 = vsel %vm264, %v248, 0.0
        %v273 = vsel %vm265, %v249, 0.0
        %v274 = vsel %vm266, %v250, 0.0
        %v275 = vsel %vm267, %v251, 0.0
        %v276 = vsel %vm268, %v252, 0.0
        %v277 = vsel %vm269, %v253, 0.0
        %v278 = vld [vmem:[%s238] sm:$0xff]
        %s279 = smul.u32 %s26, 64
        %v280 = vstv %s279
        %v281 = vsub.s32 %v278, %v280
        %v282 = vlaneseq
        %v283 = vand.u32 %v282, 127
        %284 = vset.pattern.permute.xlu0 0
        %285 = vperm.xlu0 %284, %v281
        %v286 = vpop.permute.xlu0 %285
        %vm287 = vcmp.eq.s32.totalorder %v283, %v286
        %v288 = vsel %vm287, 1, 0
        %v289 = vcvt.s32.f32 %v288
        %v290 = vld [vmem:[%s234] sm:$0xff]
        %vm291 = vcmask 523264
        %v293 = vsel %vm291, %v289, 0
        %295 = vmatprep.subr.mxu0 0.0
        %296 = vmatpush1.msra.mxu0 %v270
        %297 = vmatprep.subr.mxu0 0.0
        %298 = vmatpush1.msra.mxu0 %v271
        %299 = vmatprep.subr.mxu0 0.0
        %300 = vmatpush1.msra.mxu0 %v272
        %301 = vmatprep.subr.mxu0 0.0
        %302 = vmatpush1.msra.mxu0 %v273
        %303 = vmatprep.subr.mxu0 0.0
        %304 = vmatpush1.msra.mxu0 %v274
        %305 = vmatprep.subr.mxu0 0.0
        %306 = vmatpush1.msra.mxu0 %v275
        %307 = vmatprep.subr.mxu0 0.0
        %308 = vmatpush1.msra.mxu0 %v276
        %309 = vmatprep.subr.mxu0 0.0
        %310 = vmatpush1.msra.mxu0 %v277
        %311 = vmatprep.subr.mxu0 0.0
        %312 = vmatpush1.msra.mxu0 0.0
        %313 = vmatprep.subr.mxu0 0.0
        %314 = vmatpush1.msra.mxu0 0.0
        %315 = vmatprep.subr.mxu0 0.0
        %316 = vmatpush1.msra.mxu0 0.0
        %317 = vmatprep.subr.mxu0 0.0
        %318 = vmatpush1.msra.mxu0 0.0
        %319 = vmatprep.subr.mxu0 0.0
        %320 = vmatpush1.msra.mxu0 0.0
        %321 = vmatprep.subr.mxu0 0.0
        %322 = vmatpush1.msra.mxu0 0.0
        %323 = vmatprep.subr.mxu0 0.0
        %324 = vmatpush1.msra.mxu0 0.0
        %325 = vmatprep.subr.mxu0 0.0
        %326 = vmatpush1.msra.mxu0 0.0
        %327 = vmatprep.subr.mxu0 0.0
        %328 = vmatpush1.msra.mxu0 0.0
        %329 = vmatprep.subr.mxu0 0.0
        %330 = vmatpush1.msra.mxu0 0.0
        %331 = vmatprep.subr.mxu0 0.0
        %332 = vmatpush1.msra.mxu0 0.0
        %333 = vmatprep.subr.mxu0 0.0
        %334 = vmatpush1.msra.mxu0 0.0
        %335 = vmatprep.subr.mxu0 0.0
        %336 = vmatpush1.msra.mxu0 0.0
        %337 = vmatprep.subr.mxu0 0.0
        %338 = vmatpush1.msra.mxu0 0.0
        %339 = vmatprep.subr.mxu0 0.0
        %340 = vmatpush1.msra.mxu0 0.0
        %341 = vmatprep.subr.mxu0 0.0
        %342 = vmatpush1.msra.mxu0 0.0
        %343 = vmatprep.subr.mxu0 0.0
        %344 = vmatpush1.msra.mxu0 0.0
        %345 = vmatprep.subr.mxu0 0.0
        %346 = vmatpush1.msra.mxu0 0.0
        %347 = vmatprep.subr.mxu0 0.0
        %348 = vmatpush1.msra.mxu0 0.0
        %349 = vmatprep.subr.mxu0 0.0
        %350 = vmatpush1.msra.mxu0 0.0
        %351 = vmatprep.subr.mxu0 0.0
        %352 = vmatpush1.msra.mxu0 0.0
        %353 = vmatprep.subr.mxu0 0.0
        %354 = vmatpush1.msra.mxu0 0.0
        %355 = vmatprep.subr.mxu0 0.0
        %356 = vmatpush1.msra.mxu0 0.0
        %357 = vmatprep.subr.mxu0 0.0
        %358 = vmatpush1.msra.mxu0 0.0
        %359 = vmatprep.mubr.f32.mxu0 0.0
        %360 = vmatmul.mubr.f32.gmra.mrb[0].mxu0 %v293
        %v361 = vpop.f32.mrb[0].mxu0
        %v362 = vadd.f32 0.0, %v361
        %v363 = vpop.f32.mrb[0].mxu0
        %364 = vdwg.mxu0
        %v365 = vadd.f32 %v290, %v362
        %366 = vst [vmem:[%s234] sm:$0xff] %v365
        %s367 = sand.u32 %s130, 1
        %s368 = scalar_lea.sflag [#allocation4], %s367
        %s369 = sand.u32 %s130, 1
        %s370 = smul.addr %s369, 8
        %s371 = scalar_lea.vmem [#allocation7], %s370
        // Predicated region
        $region45: #{tpu_custom_call.1} parent=31 // pred_check
          %p372 = pneg %p140
        $region46: #{tpu_custom_call.1} parent=31 // pred_check_branch
          %374 = sbr.rel (%p372) target = $region48
        $region47: #{tpu_custom_call.1} parent=31 // pred_region
          %s376 = ssub.s32 128, 128
          %377 = vsyncadd %s368, %s376
          %s378 = sadd.s32 %s25, %s24
          %s379 = smul.addr %s378, 128
          %s380 = scalar_lea.hbm %s3, %s379
          %s382 = sshll.u32 %s371, 4
          %s383 = int_to_ptr.vmem [resolvable:$true] %s382
          %385 = dma.vmem_to_hbm [thread:$0]  %s383, 128, %s380, %s368
        $region48: #{tpu_custom_call.1} parent=31 // pred_fallthru
          _
      $region32: #{tpu_custom_call.1} parent=5 // pred_fallthru
        _
      %p386 = scmp.le.s32.totalorder 2, %s14
      // Predicated region
      $region49: #{tpu_custom_call.1} parent=5 // pred_check
        %p387 = pneg %p386
      $region50: #{tpu_custom_call.1} parent=5 // pred_check_branch
        %389 = sbr.rel (%p387) target = $region52
      $region51: #{tpu_custom_call.1} parent=5 // pred_region
        %s390 = ssub.s32 %s14, 2
        // Predicated region
        $region53: #{tpu_custom_call.1} parent=51 // pred_check
          %p391 = pneg %p146
        $region54: #{tpu_custom_call.1} parent=51 // pred_check_branch
          %393 = sbr.rel (%p391) target = $region56
        $region55: #{tpu_custom_call.1} parent=51 // pred_region
          %s394 = sand.u32 %s131, 1
          %s395 = scalar_lea.sflag [#allocation4], %s394
          %s396 = sand.u32 %s131, 1
          %s397 = smul.addr %s396, 8
          %s398 = scalar_lea.vmem [#allocation7], %s397
          %399 = dma.done %s395, 128
        $region56: #{tpu_custom_call.1} parent=51 // pred_fallthru
          _
      $region52: #{tpu_custom_call.1} parent=5 // pred_fallthru
        _
    $region6: #{tpu_custom_call.1} parent=1 // loop_footer
      %s18 = sadd.s32 1, %s14
    $region7: #{tpu_custom_call.1} parent=1 // loop_footer_branch
      %13 = sbr.rel target = $region3
    $region8: #{tpu_custom_call.1} parent=1 // loop_exit
      _
    %400 = vsyncpa [#allocation3], 1
    %s401 = scalar_lea.sflag [#allocation3], 1
    %402 = vsyncpa %s401, 1
    %403 = vsyncpa [#allocation6], 1
    %404 = vsyncpa [#allocation4], 1
    %s405 = scalar_lea.sflag [#allocation4], 1
    %406 = vsyncpa %s405, 1

</llo_original>
